<compile_context>
chip_gen: v6e
topology: v6e:2x2x1
jax: 0.10.0
libtpu: 0.0.40
codegen_flags: <defaults>
</compile_context>

<pallas_src>
import jax
import jax.numpy as jnp
from jax.experimental import pallas as pl
from jax.experimental.pallas import tpu as pltpu

LOG_2PI = 1.8378770664093453  # log(2*pi)


def _softplus(x):
    # numerically stable softplus (VPU + EUP), log1p form
    return jnp.maximum(x, 0.0) + jnp.log1p(jnp.exp(-jnp.abs(x)))


def _round_up(a, b):
    return ((a + b - 1) // b) * b


def _make_elbo_kernel(n_actual, tile_n):
    """Kernel closed over the static shapes (true batch size, batch tile)."""

    def kernel(params_ref, x_ref, y_ref, out_ref):
        # params_ref: (8, d)      row0=mu, row1=rho, row2=eps, rows 3..7 unused
        # x_ref:      (tile_n, d) current batch tile of the design matrix
        # y_ref:      (1, tile_n) labels, lane-dense
        # out_ref:    (1, 1, 128) per-tile partial ELBO (broadcast across lanes)
        p = params_ref[...]
        mu = p[0:1, :]                                   # (1, d)
        rho = jnp.maximum(p[1:2, :], -11.5)              # truncate()
        eps = p[2:3, :]                                  # (1, d) reparam noise
        sigma = _softplus(rho)                           # (1, d)
        z = mu + eps * sigma                             # (1, d)

        # logits = z @ x^T -> (1, tile_n), lane-dense, on the MXU.
        x = x_ref[...]                                   # (tile_n, d)
        logits = jax.lax.dot_general(
            z.astype(x.dtype), x,
            dimension_numbers=(((1,), (1,)), ((), ())),
            preferred_element_type=jnp.float32)          # (1, tile_n)

        # Mask batch rows past the true N: the ragged last tile's extra rows
        # hold unspecified data, so use jnp.where (no 0*NaN poisoning).
        row0 = pl.program_id(0) * tile_n
        rid = row0 + jax.lax.broadcasted_iota(jnp.int32, (1, tile_n), 1)
        rmask = rid < n_actual

        y = y_ref[...].astype(jnp.float32)               # (1, tile_n)
        # Bernoulli(logits=yhat).log_prob(y) = y*yhat - softplus(yhat)
        ll_terms = jnp.where(rmask, y * logits - _softplus(logits), 0.0)
        ll_partial = jnp.sum(ll_terms)

        # Every tile contributes -log_lik_partial; tile 0 alone adds the
        # parameter-only terms (avoids num_tiles-1 redundant cross-lane
        # reductions, and stays correct with a "parallel"/megacore grid axis).
        out_ref[...] = jnp.broadcast_to(-ll_partial, (1, 1, 128)).astype(jnp.float32)

        @pl.when(pl.program_id(0) == 0)
        def _():
            # entropy = sum Normal(mu, sigma).log_prob(z); (z - mu)/sigma == eps exactly
            entropy = jnp.sum(-jnp.log(sigma) - 0.5 * LOG_2PI - 0.5 * eps * eps)
            # log_prior = sum Normal(0, 1).log_prob(z)
            log_prior = jnp.sum(-0.5 * LOG_2PI - 0.5 * z * z)
            out_ref[...] = out_ref[...] + (entropy - log_prior)

    return kernel


def elbo_pallas(lam2d, eps, x, y, *, max_tile_n=None,
                target_tile_bytes=8 * 1024 * 1024,
                compute_dtype=jnp.float32):
    """ELBO of Bayesian logistic regression (scalar float32).

    lam2d: (2, d)  row0 = Lambda[:,0] (mu), row1 = Lambda[:,1] (pre-softplus rho)
    eps:   (1, d)  reparameterization noise
    x:     (N, d)  design matrix
    y:     (N, 1)  binary labels
    """
    n, d = x.shape
    itemsize = jnp.dtype(compute_dtype).itemsize

    # Batch tile: ~target_tile_bytes of x per buffer (double-buffered by the
    # BlockSpec pipeline), multiple of 128 rows (y's lane dim). Capped so at
    # least two grid steps exist when the batch allows (uses both v7x cores).
    tile_n = max(128, (target_tile_bytes // (d * itemsize)) // 128 * 128)
    if n > 128:
        tile_n = min(tile_n, _round_up((n + 1) // 2, 128))
    tile_n = min(tile_n, _round_up(n, 128))
    if max_tile_n is not None:
        tile_n = min(tile_n, max(128, (max_tile_n // 128) * 128))
    num_tiles = (n + tile_n - 1) // tile_n

    xf = x.astype(compute_dtype)                          # no padding, fed as-is
    yf = jnp.reshape(y, (1, n)).astype(jnp.float32)       # lane-dense labels

    # Tiny resident parameter operand: (8, d), sublane-aligned.
    params = jnp.zeros((8, d), jnp.float32)
    params = params.at[0, :].set(lam2d[0].astype(jnp.float32))          # mu
    params = params.at[1, :].set(lam2d[1].astype(jnp.float32))          # rho (pre-softplus)
    params = params.at[2, :].set(eps.reshape(-1).astype(jnp.float32))   # reparam noise

    kernel = _make_elbo_kernel(n, tile_n)

    partials = pl.pallas_call(
        kernel,
        out_shape=jax.ShapeDtypeStruct((num_tiles, 1, 128), jnp.float32),
        grid_spec=pltpu.PrefetchScalarGridSpec(
            num_scalar_prefetch=0,
            grid=(num_tiles,),
            in_specs=[
                pl.BlockSpec((8, d), lambda i: (0, 0)),        # params (resident)
                pl.BlockSpec((tile_n, d), lambda i: (i, 0)),   # x batch tile
                pl.BlockSpec((1, tile_n), lambda i: (0, i)),   # y batch tile (lane-dense)
            ],
            out_specs=pl.BlockSpec((1, 1, 128), lambda i: (i, 0, 0)),
        ),
        compiler_params=pltpu.CompilerParams(
            dimension_semantics=("parallel",),
            vmem_limit_bytes=32 * 1024 * 1024,
        ),
        cost_estimate=pl.CostEstimate(
            flops=2 * n * d + 16 * n + 16 * d,
            transcendentals=2 * n + 4 * d,
            bytes_accessed=n * d * itemsize + n * 4 + 8 * d * 4 + num_tiles * 128 * 4,
        ),
    )(params, xf, yf)

    # Final tiny combine outside the kernel (keeps the grid axis parallel-safe).
    return jnp.sum(partials[:, 0, 0])


def elbo_reference(lam2d, eps, x, y):
    mu = lam2d[0]
    rho = jnp.maximum(lam2d[1], -11.5)
    sigma = jax.nn.softplus(rho)
    z = mu + eps[0] * sigma
    entropy = jnp.sum(-jnp.log(sigma) - 0.5 * LOG_2PI - 0.5 * ((z - mu) / sigma) ** 2)
    log_prior = jnp.sum(-0.5 * LOG_2PI - 0.5 * z * z)
    logits = x @ z[:, None]
    log_lik = jnp.sum(y * logits - jax.nn.softplus(logits))
    return entropy - log_lik - log_prior


if __name__ == "__main__":
    key = jax.random.PRNGKey(0)
    k_lam, k_eps, k_x, k_y = jax.random.split(key, 4)

    # Small shapes that still exercise the grid (4 tiles), the ragged last
    # batch tile (500 = 3*128 + 116) and the unaligned feature dim (200).
    N, D = 500, 200

    # TODO(synk): epsilon ~ N(0,1) is drawn host-side and passed in (the PyTorch
    # module draws it inside forward); in-kernel pltpu PRNG could replace this.
    lam2d = jax.random.normal(k_lam, (2, D), dtype=jnp.float32)   # Lambda^T: row0=mu, row1=rho
    eps = jax.random.normal(k_eps, (1, D), dtype=jnp.float32)     # reparam noise
    x = jax.random.normal(k_x, (N, D), dtype=jnp.float32)         # design matrix
    y = jax.random.bernoulli(k_y, 0.5, (N, 1)).astype(jnp.float32)  # labels

    out = jax.block_until_ready(elbo_pallas(lam2d, eps, x, y, max_tile_n=128))
    ref = elbo_reference(lam2d, eps, x, y)

    assert jnp.allclose(out, ref, rtol=1e-4, atol=1e-3), (out, ref)
    print("KERNEL_OK")
</pallas_src>

<mosaic_0001>
module attributes {stable_mosaic.version = 11 : i64} {
  func.func @kernel(%arg0: i32, %arg1: memref<8x200xf32, #tpu.memory_space<vmem>>, %arg2: memref<128x200xf32, #tpu.memory_space<vmem>>, %arg3: memref<1x128xf32, #tpu.memory_space<vmem>>, %arg4: memref<1x1x128xf32, #tpu.memory_space<vmem>>) attributes {dimension_semantics = [#tpu.dimension_semantics<parallel>], iteration_bounds = array<i64: 4>, scalar_prefetch = 0 : i64, scratch_operands = 0 : i64, tpu.core_type = #tpu.core_type<tc>, window_params = [{pipeline_mode = #tpu.pipeline_mode<synchronous>, transform_indices = @transform_0, window_bounds = array<i64: 8, 200>}, {transform_indices = @transform_1, window_bounds = array<i64: 128, 200>}, {transform_indices = @transform_2, window_bounds = array<i64: 1, 128>}, {transform_indices = @transform_3, window_bounds = array<i64: 1, 1, 128>}]} {
    %c0 = arith.constant 0 : index
    %c0_0 = arith.constant 0 : index
    %0 = vector.load %arg1[%c0, %c0_0] : memref<8x200xf32, #tpu.memory_space<vmem>>, vector<8x200xf32>
    %1 = vector.extract_strided_slice %0 {offsets = [0, 0], sizes = [1, 200], strides = [1, 1]} : vector<8x200xf32> to vector<1x200xf32>
    %2 = vector.extract_strided_slice %0 {offsets = [1, 0], sizes = [1, 200], strides = [1, 1]} : vector<8x200xf32> to vector<1x200xf32>
    %cst = arith.constant -1.150000e+01 : f32
    %3 = vector.broadcast %cst : f32 to vector<1x200xf32>
    %4 = arith.maximumf %2, %3 : vector<1x200xf32>
    %5 = vector.extract_strided_slice %0 {offsets = [2, 0], sizes = [1, 200], strides = [1, 1]} : vector<8x200xf32> to vector<1x200xf32>
    %cst_1 = arith.constant 0.000000e+00 : f32
    %6 = vector.broadcast %cst_1 : f32 to vector<1x200xf32>
    %7 = arith.maximumf %4, %6 : vector<1x200xf32>
    %8 = math.absf %4 : vector<1x200xf32>
    %cst_2 = arith.constant 0.000000e+00 : f32
    %9 = vector.broadcast %cst_2 : f32 to vector<1x200xf32>
    %10 = arith.subf %9, %8 : vector<1x200xf32>
    %11 = math.exp %10 : vector<1x200xf32>
    %12 = math.log1p %11 : vector<1x200xf32>
    %13 = arith.addf %7, %12 : vector<1x200xf32>
    %14 = arith.mulf %5, %13 : vector<1x200xf32>
    %15 = arith.addf %1, %14 : vector<1x200xf32>
    %c0_3 = arith.constant 0 : index
    %c0_4 = arith.constant 0 : index
    %16 = vector.load %arg2[%c0_3, %c0_4] : memref<128x200xf32, #tpu.memory_space<vmem>>, vector<128x200xf32>
    %cst_5 = arith.constant dense<0.000000e+00> : vector<1x128xf32>
    %17 = tpu.matmul %15, %16, %cst_5 {dimension_numbers = #tpu.dot_dimension_numbers<[1], [1], [0], [0], [0, 0, 1, 0], [], []>} : vector<1x200xf32>, vector<128x200xf32>, vector<1x128xf32> -> vector<1x128xf32>
    %c128_i32 = arith.constant 128 : i32
    %18 = arith.muli %arg0, %c128_i32 : i32
    %19 = tpu.iota {dimensions = array<i32: 1>} : vector<1x128xi32>
    %20 = vector.broadcast %18 : i32 to vector<1x128xi32>
    %21 = arith.addi %20, %19 : vector<1x128xi32>
    %c500_i32 = arith.constant 500 : i32
    %22 = vector.broadcast %c500_i32 : i32 to vector<1x128xi32>
    %23 = arith.cmpi slt, %21, %22 : vector<1x128xi32>
    %c0_6 = arith.constant 0 : index
    %c0_7 = arith.constant 0 : index
    %24 = vector.load %arg3[%c0_6, %c0_7] : memref<1x128xf32, #tpu.memory_space<vmem>>, vector<1x128xf32>
    %25 = arith.mulf %24, %17 : vector<1x128xf32>
    %cst_8 = arith.constant 0.000000e+00 : f32
    %26 = vector.broadcast %cst_8 : f32 to vector<1x128xf32>
    %27 = arith.maximumf %17, %26 : vector<1x128xf32>
    %28 = math.absf %17 : vector<1x128xf32>
    %cst_9 = arith.constant 0.000000e+00 : f32
    %29 = vector.broadcast %cst_9 : f32 to vector<1x128xf32>
    %30 = arith.subf %29, %28 : vector<1x128xf32>
    %31 = math.exp %30 : vector<1x128xf32>
    %32 = math.log1p %31 : vector<1x128xf32>
    %33 = arith.addf %27, %32 : vector<1x128xf32>
    %34 = arith.subf %25, %33 : vector<1x128xf32>
    %cst_10 = arith.constant 0.000000e+00 : f32
    %35 = vector.broadcast %cst_10 : f32 to vector<1x128xf32>
    %36 = arith.select %23, %34, %35 : vector<1x128xi1>, vector<1x128xf32>
    %37 = vector.shape_cast %36 : vector<1x128xf32> to vector<1x1x128xf32>
    %cst_11 = arith.constant dense<0.000000e+00> : vector<1xf32>
    %38 = vector.multi_reduction <add>, %37, %cst_11 [1, 2] : vector<1x1x128xf32> to vector<1xf32>
    %39 = vector.shape_cast %38 : vector<1xf32> to vector<1x1x1xf32>
    %40 = vector.extract %39[0, 0, 0] : f32 from vector<1x1x1xf32>
    %cst_12 = arith.constant 0.000000e+00 : f32
    %41 = arith.subf %cst_12, %40 : f32
    %42 = vector.broadcast %41 : f32 to vector<1x1x128xf32>
    %c0_13 = arith.constant 0 : index
    %c0_14 = arith.constant 0 : index
    %c0_15 = arith.constant 0 : index
    %43 = vector.load %arg4[%c0_13, %c0_14, %c0_15] : memref<1x1x128xf32, #tpu.memory_space<vmem>>, vector<1x1x128xf32>
    tpu.vector_store %arg4[%c0_13, %c0_14, %c0_15], %42 {strides = array<i32>} : memref<1x1x128xf32, #tpu.memory_space<vmem>>, vector<1x1x128xf32>,
    %c0_i32 = arith.constant 0 : i32
    %44 = arith.cmpi eq, %arg0, %c0_i32 : i32
    %45 = arith.extui %44 : i1 to i32
    %c0_i32_16 = arith.constant 0 : i32
    %46 = arith.cmpi ne, %45, %c0_i32_16 : i32
    scf.if %46 {
      %47 = math.log %13 : vector<1x200xf32>
      %cst_17 = arith.constant 0.000000e+00 : f32
      %48 = vector.broadcast %cst_17 : f32 to vector<1x200xf32>
      %49 = arith.subf %48, %47 : vector<1x200xf32>
      %cst_18 = arith.constant 0.918938517 : f32
      %50 = vector.broadcast %cst_18 : f32 to vector<1x200xf32>
      %51 = arith.subf %49, %50 : vector<1x200xf32>
      %cst_19 = arith.constant 5.000000e-01 : f32
      %52 = vector.broadcast %cst_19 : f32 to vector<1x200xf32>
      %53 = arith.mulf %52, %5 : vector<1x200xf32>
      %54 = arith.mulf %53, %5 : vector<1x200xf32>
      %55 = arith.subf %51, %54 : vector<1x200xf32>
      %56 = vector.shape_cast %55 : vector<1x200xf32> to vector<1x1x200xf32>
      %cst_20 = arith.constant dense<0.000000e+00> : vector<1xf32>
      %57 = vector.multi_reduction <add>, %56, %cst_20 [1, 2] : vector<1x1x200xf32> to vector<1xf32>
      %58 = vector.shape_cast %57 : vector<1xf32> to vector<1x1x1xf32>
      %59 = vector.extract %58[0, 0, 0] : f32 from vector<1x1x1xf32>
      %cst_21 = arith.constant 5.000000e-01 : f32
      %60 = vector.broadcast %cst_21 : f32 to vector<1x200xf32>
      %61 = arith.mulf %60, %15 : vector<1x200xf32>
      %62 = arith.mulf %61, %15 : vector<1x200xf32>
      %cst_22 = arith.constant -0.918938517 : f32
      %63 = vector.broadcast %cst_22 : f32 to vector<1x200xf32>
      %64 = arith.subf %63, %62 : vector<1x200xf32>
      %65 = vector.shape_cast %64 : vector<1x200xf32> to vector<1x1x200xf32>
      %cst_23 = arith.constant dense<0.000000e+00> : vector<1xf32>
      %66 = vector.multi_reduction <add>, %65, %cst_23 [1, 2] : vector<1x1x200xf32> to vector<1xf32>
      %67 = vector.shape_cast %66 : vector<1xf32> to vector<1x1x1xf32>
      %68 = vector.extract %67[0, 0, 0] : f32 from vector<1x1x1xf32>
      %c0_24 = arith.constant 0 : index
      %c0_25 = arith.constant 0 : index
      %c0_26 = arith.constant 0 : index
      %69 = vector.load %arg4[%c0_24, %c0_25, %c0_26] : memref<1x1x128xf32, #tpu.memory_space<vmem>>, vector<1x1x128xf32>
      %70 = arith.subf %59, %68 : f32
      %71 = vector.broadcast %70 : f32 to vector<1x1x128xf32>
      %72 = arith.addf %69, %71 : vector<1x1x128xf32>
      %c0_27 = arith.constant 0 : index
      %c0_28 = arith.constant 0 : index
      %c0_29 = arith.constant 0 : index
      %73 = vector.load %arg4[%c0_27, %c0_28, %c0_29] : memref<1x1x128xf32, #tpu.memory_space<vmem>>, vector<1x1x128xf32>
      tpu.vector_store %arg4[%c0_27, %c0_28, %c0_29], %72 {strides = array<i32>} : memref<1x1x128xf32, #tpu.memory_space<vmem>>, vector<1x1x128xf32>,
    } else {
    }
    return
  }
  func.func @transform_0(%arg0: i32) -> (i32, i32) {
    %c0_i32 = arith.constant 0 : i32
    %c0_i32_0 = arith.constant 0 : i32
    %c0_i32_1 = arith.constant 0 : i32
    return %c0_i32, %c0_i32_0 : i32, i32
  }
  func.func @transform_1(%arg0: i32) -> (i32, i32) {
    %c0_i32 = arith.constant 0 : i32
    %c0_i32_0 = arith.constant 0 : i32
    return %arg0, %c0_i32 : i32, i32
  }
  func.func @transform_2(%arg0: i32) -> (i32, i32) {
    %c0_i32 = arith.constant 0 : i32
    %c0_i32_0 = arith.constant 0 : i32
    return %c0_i32, %arg0 : i32, i32
  }
  func.func @transform_3(%arg0: i32) -> (i32, i32, i32) {
    %c0_i32 = arith.constant 0 : i32
    %c0_i32_0 = arith.constant 0 : i32
    %c0_i32_1 = arith.constant 0 : i32
    return %arg0, %c0_i32, %c0_i32_0 : i32, i32, i32
  }
}

</mosaic_0001>

<llo_original>
// kernel: tpu_custom_call.1
$region0: #{tpu_custom_call.1}
  #allocation0 [shape = 'u32[]', space=smem, size = 0x4, offset = 0x4, fixed_abs, tag = 'smem constant byte address 0x4 - core index']
  #allocation1 [shape = 'u32[144,128]{1,0:T(1,128)}', space=vmem, size = 0x12000, scoped, tag = 'internal scratch']
  %s0 = inlined_call_operand.vmem [shape: f32[8,200], index: 0, kind: input, shape index: {}]
  %s1 = inlined_call_operand.vmem [shape: f32[500,200], index: 1, kind: input, shape index: {}]
  %s2 = inlined_call_operand.vmem [shape: f32[1,500], index: 2, kind: input, shape index: {}]
  %s3 = inlined_call_operand.hbm [shape: f32[4,1,128], index: 3, kind: output, shape index: {}]
  %s4 = sld [smem:[#allocation0]]
  $region49: #{tpu_custom_call.1} parent=0
    _
  %s6 = ssub.s32 1, %s4
  %s7 = scalar_select 0, %s6, %s4
  $region1: #{tpu_custom_call.1} parent=0
    #allocation2 [shape = 'u8[1024]{0}', space=vmem, size = 0x400, scoped, tag = 'output window, operand 0']
    #allocation3 [shape = 's32[2]{0}', space=sflag, size = 0x8, scoped, tag = 'scoped memory for tpu_custom_call.1']
    %8 = vsyncpa [#allocation3], 0
    %s9 = scalar_lea.sflag [#allocation3], 1
    %10 = vsyncpa %s9, 0
    loop: start=0, step=1, limit=6
    $region2: #{tpu_custom_call.1} parent=1 // loop_pre_header
      _
    $region3: #{tpu_custom_call.1} parent=1 // loop_header
      %s12 = sphi 0, %s16
      %p13 = scmp.ge.s32.totalorder %s12, 6
      %s20 = sphi 0, %s20
      %s22 = sphi 0, %s20
      %s23 = sphi 0, %s22
      %s37 = sphi 0, %s23
      %s43 = sphi 0, %s45
      %s46 = sphi 0, %s43
      %s47 = sphi 0, %s46
      %s63 = sphi 0, %s47
      %s69 = sphi 0, %s71
      %s72 = sphi 0, %s69
      %s73 = sphi 0, %s72
      %s89 = sphi 0, %s73
      %s95 = sphi 0, %s97
      %s98 = sphi 0, %s95
      %s99 = sphi 0, %s98
      %s115 = sphi 0, %s99
    $region4: #{tpu_custom_call.1} parent=1 // loop_header_branch
      %15 = sbr.rel (%p13) target = $region8
    $region5: #{tpu_custom_call.1} parent=1 // loop_body
      %s17 = ssub.s32 %s12, 1
      %s18 = ssub.s32 %s12, 2
      %s19 = sadd.s32 %s12, 1
      %s21 = sadd.s32 %s20, 1
      %p24 = scmp.eq.s32.totalorder %s12, 3
      %p25 = scmp.ne.s32.totalorder %s20, %s22
      %p26 = scmp.eq.s32.totalorder %s12, 0
      %p27 = por %p25, %p26
      %p28 = scmp.ne.s32.totalorder %s20, %s22
      %p29 = scmp.eq.s32.totalorder %s17, 3
      %p30 = por %p28, %p29
      %p31 = scmp.ne.s32.totalorder %s22, %s23
      %p32 = scmp.eq.s32.totalorder %s17, 0
      %p33 = por %p31, %p32
      %p34 = scmp.ne.s32.totalorder %s22, %s23
      %p35 = scmp.eq.s32.totalorder %s18, 3
      %p36 = por %p34, %p35
      %p38 = scmp.ne.s32.totalorder %s23, %s37
      %p39 = scmp.eq.s32.totalorder %s18, 0
      %p40 = por %p38, %p39
      %s41 = ssub.s32 %s12, %s19
      %p42 = scmp.eq.s32.totalorder %s41, 0
      %s44 = sadd.s32 %s43, 1
      %s45 = scalar_select %p42, %s43, %s44
      %p48 = pneg %p42
      %p49 = scmp.eq.s32.totalorder %s12, 3
      %p50 = por %p48, %p49
      %p51 = scmp.ne.s32.totalorder %s43, %s46
      %p52 = scmp.eq.s32.totalorder %s12, 0
      %p53 = por %p51, %p52
      %p54 = scmp.ne.s32.totalorder %s43, %s46
      %p55 = scmp.eq.s32.totalorder %s17, 3
      %p56 = por %p54, %p55
      %p57 = scmp.ne.s32.totalorder %s46, %s47
      %p58 = scmp.eq.s32.totalorder %s17, 0
      %p59 = por %p57, %p58
      %p60 = scmp.ne.s32.totalorder %s46, %s47
      %p61 = scmp.eq.s32.totalorder %s18, 3
      %p62 = por %p60, %p61
      %p64 = scmp.ne.s32.totalorder %s47, %s63
      %p65 = scmp.eq.s32.totalorder %s18, 0
      %p66 = por %p64, %p65
      %s67 = ssub.s32 %s12, %s19
      %p68 = scmp.eq.s32.totalorder %s67, 0
      %s70 = sadd.s32 %s69, 1
      %s71 = scalar_select %p68, %s69, %s70
      %p74 = pneg %p68
      %p75 = scmp.eq.s32.totalorder %s12, 3
      %p76 = por %p74, %p75
      %p77 = scmp.ne.s32.totalorder %s69, %s72
      %p78 = scmp.eq.s32.totalorder %s12, 0
      %p79 = por %p77, %p78
      %p80 = scmp.ne.s32.totalorder %s69, %s72
      %p81 = scmp.eq.s32.totalorder %s17, 3
      %p82 = por %p80, %p81
      %p83 = scmp.ne.s32.totalorder %s72, %s73
      %p84 = scmp.eq.s32.totalorder %s17, 0
      %p85 = por %p83, %p84
      %p86 = scmp.ne.s32.totalorder %s72, %s73
      %p87 = scmp.eq.s32.totalorder %s18, 3
      %p88 = por %p86, %p87
      %p90 = scmp.ne.s32.totalorder %s73, %s89
      %p91 = scmp.eq.s32.totalorder %s18, 0
      %p92 = por %p90, %p91
      %s93 = ssub.s32 %s12, %s19
      %p94 = scmp.eq.s32.totalorder %s93, 0
      %s96 = sadd.s32 %s95, 1
      %s97 = scalar_select %p94, %s95, %s96
      %p100 = pneg %p94
      %p101 = scmp.eq.s32.totalorder %s12, 3
      %p102 = por %p100, %p101
      %p103 = scmp.ne.s32.totalorder %s95, %s98
      %p104 = scmp.eq.s32.totalorder %s12, 0
      %p105 = por %p103, %p104
      %p106 = scmp.ne.s32.totalorder %s95, %s98
      %p107 = scmp.eq.s32.totalorder %s17, 3
      %p108 = por %p106, %p107
      %p109 = scmp.ne.s32.totalorder %s98, %s99
      %p110 = scmp.eq.s32.totalorder %s17, 0
      %p111 = por %p109, %p110
      %p112 = scmp.ne.s32.totalorder %s98, %s99
      %p113 = scmp.eq.s32.totalorder %s18, 3
      %p114 = por %p112, %p113
      %p116 = scmp.ne.s32.totalorder %s99, %s115
      %p117 = scmp.eq.s32.totalorder %s18, 0
      %p118 = por %p116, %p117
      %p119 = scmp.le.s32.totalorder 1, %s12
      %p120 = scmp.lt.s32.totalorder %s12, 5
      %p121 = pnand %p119, %p120
      %p122 = pneg %p121
      // Predicated region
      $region9: #{tpu_custom_call.1} parent=5 // pred_check
        _
      $region10: #{tpu_custom_call.1} parent=5 // pred_check_branch
        %124 = sbr.rel (%p121) target = $region12
      $region11: #{tpu_custom_call.1} parent=5 // pred_region
        %s125 = ssub.s32 %s12, 1
        // Predicated region
        $region13: #{tpu_custom_call.1} parent=11 // pred_check
          %p126 = pneg %p33
        $region14: #{tpu_custom_call.1} parent=11 // pred_check_branch
          %128 = sbr.rel (%p126) target = $region16
        $region15: #{tpu_custom_call.1} parent=11 // pred_region
          _
        $region16: #{tpu_custom_call.1} parent=11 // pred_fallthru
          _
      $region12: #{tpu_custom_call.1} parent=5 // pred_fallthru
        _
      %p129 = scmp.lt.s32.totalorder %s12, 4
      // Predicated region
      $region17: #{tpu_custom_call.1} parent=5 // pred_check
        %p130 = pneg %p129
      $region18: #{tpu_custom_call.1} parent=5 // pred_check_branch
        %132 = sbr.rel (%p130) target = $region20
      $region19: #{tpu_custom_call.1} parent=5 // pred_region
        // Predicated region
        $region21: #{tpu_custom_call.1} parent=19 // pred_check
          %p133 = pneg %p53
        $region22: #{tpu_custom_call.1} parent=19 // pred_check_branch
          %135 = sbr.rel (%p133) target = $region24
        $region23: #{tpu_custom_call.1} parent=19 // pred_region
          %s136 = smul.u32 16, %s12
          %s137 = ssub.s32 63, %s136
          %p138 = scmp.lt.s32.totalorder %s137, 16
          %s139 = scalar_select %p138, %s137, 16
          %s140 = smul.u32 128, %s139
          %s141 = smul.u32 %s140, 2
          %p142 = scmp.lt.s32.totalorder %s136, 62
          %s143 = scalar_select %p142, %s136, 62
          %s144 = smul.addr %s143, 2
          %s145 = smul.addr %s144, 8
          %s146 = scalar_lea.vmem %s1, %s145
          %s147 = smul.u32 16, %s12
          %s148 = ssub.s32 63, %s147
          %p149 = scmp.lt.s32.totalorder %s148, 16
          %s150 = scalar_select %p149, %s148, 16
          %s151 = smul.u32 128, %s150
          %s152 = smul.u32 %s151, 2
        $region24: #{tpu_custom_call.1} parent=19 // pred_fallthru
          _
        // Predicated region
        $region25: #{tpu_custom_call.1} parent=19 // pred_check
          %p153 = pneg %p79
        $region26: #{tpu_custom_call.1} parent=19 // pred_check_branch
          %155 = sbr.rel (%p153) target = $region28
        $region27: #{tpu_custom_call.1} parent=19 // pred_region
          %p156 = scmp.lt.s32.totalorder %s12, 3
          %s157 = scalar_select %p156, %s12, 3
          %s158 = scalar_lea.vmem %s2, %s157
        $region28: #{tpu_custom_call.1} parent=19 // pred_fallthru
          _
      $region20: #{tpu_custom_call.1} parent=5 // pred_fallthru
        _
      %p159 = scmp.le.s32.totalorder 1, %s12
      %p160 = scmp.lt.s32.totalorder %s12, 5
      %p161 = pnand %p159, %p160
      %p162 = pneg %p161
      // Predicated region
      $region29: #{tpu_custom_call.1} parent=5 // pred_check
        _
      $region30: #{tpu_custom_call.1} parent=5 // pred_check_branch
        %164 = sbr.rel (%p161) target = $region32
      $region31: #{tpu_custom_call.1} parent=5 // pred_region
        %s165 = ssub.s32 %s12, 1
        %p166 = pneg %p33
        %p167 = pneg %p30
        %s168 = smul.u32 16, %s17
        %s169 = ssub.s32 63, %s168
        %p170 = scmp.lt.s32.totalorder %s169, 16
        %s171 = scalar_select %p170, %s169, 16
        %s172 = smul.u32 128, %s171
        %s173 = smul.u32 %s172, 2
        %p174 = scmp.lt.s32.totalorder %s168, 62
        %s175 = scalar_select %p174, %s168, 62
        %s176 = smul.addr %s175, 2
        %s177 = smul.addr %s176, 8
        %s178 = scalar_lea.vmem %s1, %s177
        %p179 = pneg %p59
        %p180 = pneg %p56
        %p181 = scmp.lt.s32.totalorder %s17, 3
        %s182 = scalar_select %p181, %s17, 3
        %s183 = scalar_lea.vmem %s2, %s182
        %p184 = pneg %p85
        %p185 = pneg %p82
        %p186 = pneg %p111
        %p187 = pneg %p108
        %s188 = sand.u32 %s98, 1
        %s189 = scalar_lea.sflag [#allocation3], %s188
        %s190 = sand.u32 %s98, 1
        %s191 = scalar_lea.vmem [#allocation2], %s190
        %s192 = smul.u32 16, %s17
        %s193 = ssub.s32 63, %s192
        %p194 = scmp.lt.s32.totalorder %s193, 16
        %s195 = scalar_select %p194, %s193, 16
        %s196 = smul.u32 128, %s195
        %s197 = smul.u32 %s196, 2
        %p198 = scmp.lt.s32.totalorder %s192, 62
        %s199 = scalar_select %p198, %s192, 62
        %s200 = smul.addr %s199, 2
        %s201 = smul.addr %s200, 8
        %s202 = scalar_lea.vmem %s1, %s201
        %s203 = smul.u32 16, %s17
        %s204 = ssub.s32 63, %s203
        %p205 = scmp.lt.s32.totalorder %s204, 16
        %s206 = scalar_select %p205, %s204, 16
        %s207 = smul.u32 128, %s206
        %s208 = smul.u32 %s207, 2
        %p209 = scmp.lt.s32.totalorder %s17, 3
        %s210 = scalar_select %p209, %s17, 3
        %s211 = scalar_lea.vmem %s2, %s210
        %v212 = vld [vmem:[%s0] sm:$0xff]
        %v213 = vld [vmem:[%s0 + $0x8] sm:$0xff]
        %v214 = vmax.f32 %v212, -11.5
        %v215 = vmax.f32 %v213, -11.5
        %v216 = vmax.f32 %v214, 0.0
        %v217 = vmax.f32 %v215, 0.0
        %v218 = vand.u32 2147483647, %v214
        %v219 = vand.u32 2147483647, %v215
        %v220 = vsub.f32 0.0, %v218
        %v221 = vsub.f32 0.0, %v219
        %v222 = vmul.f32 %v220, 1.442695
        %v223 = vpow.pop %v222
        %v224 = vmul.f32 %v221, 1.442695
        %v225 = vpow.pop %v224
        %v226 = vadd.f32 %v223, 1.0
        %v227 = vlog2.pop %v226
        %v228 = vmul.f32 %v227, 0.6931472
        %v229 = vmul.f32 -0.5, %v223
        %v230 = vadd.f32 %v229, 1.0
        %v231 = vmul.f32 %v230, %v223
        %v232 = vand.u32 2147483647, %v223
        %vm233 = vcmp.lt.f32.partialorder %v232, 0.0004427343
        %v234 = vsel %vm233, %v231, %v228
        %v235 = vadd.f32 %v225, 1.0
        %v236 = vlog2.pop %v235
        %v237 = vmul.f32 %v236, 0.6931472
        %v238 = vmul.f32 -0.5, %v225
        %v239 = vadd.f32 %v238, 1.0
        %v240 = vmul.f32 %v239, %v225
        %v241 = vand.u32 2147483647, %v225
        %vm242 = vcmp.lt.f32.partialorder %v241, 0.0004427343
        %v243 = vsel %vm242, %v240, %v237
        %v244 = vadd.f32 %v216, %v234
        %v245 = vadd.f32 %v217, %v243
        %v248 = vrot.slane %v244, 7
        %v249 = vrot.slane %v245, 7
        %v252 = vmul.f32 %v212, %v248
        %v253 = vmul.f32 %v213, %v249
        %v256 = vrot.slane %v252, 2
        %v257 = vrot.slane %v253, 2
        %v260 = vadd.f32 %v212, %v256
        %v261 = vadd.f32 %v213, %v257
        %v262 = vld [vmem:[%s202] sm:$0xff]
        %v263 = vld [vmem:[%s202 + $0x8] sm:$0xff]
        %v264 = vld [vmem:[%s202 + $0x10] sm:$0xff]
        %v265 = vld [vmem:[%s202 + $0x18] sm:$0xff]
        %v266 = vld [vmem:[%s202 + $0x20] sm:$0xff]
        %v267 = vld [vmem:[%s202 + $0x28] sm:$0xff]
        %v268 = vld [vmem:[%s202 + $0x30] sm:$0xff]
        %v269 = vld [vmem:[%s202 + $0x38] sm:$0xff]
        %v270 = vld [vmem:[%s202 + $0x40] sm:$0xff]
        %v271 = vld [vmem:[%s202 + $0x48] sm:$0xff]
        %v272 = vld [vmem:[%s202 + $0x50] sm:$0xff]
        %v273 = vld [vmem:[%s202 + $0x58] sm:$0xff]
        %v274 = vld [vmem:[%s202 + $0x60] sm:$0xff]
        %v275 = vld [vmem:[%s202 + $0x68] sm:$0xff]
        %v276 = vld [vmem:[%s202 + $0x70] sm:$0xff]
        %v277 = vld [vmem:[%s202 + $0x78] sm:$0xff]
        %v278 = vld [vmem:[%s202 + $0x80] sm:$0xff]
        %v279 = vld [vmem:[%s202 + $0x88] sm:$0xff]
        %v280 = vld [vmem:[%s202 + $0x90] sm:$0xff]
        %v281 = vld [vmem:[%s202 + $0x98] sm:$0xff]
        %v282 = vld [vmem:[%s202 + $0xa0] sm:$0xff]
        %v283 = vld [vmem:[%s202 + $0xa8] sm:$0xff]
        %v284 = vld [vmem:[%s202 + $0xb0] sm:$0xff]
        %v285 = vld [vmem:[%s202 + $0xb8] sm:$0xff]
        %v286 = vld [vmem:[%s202 + $0xc0] sm:$0xff]
        %v287 = vld [vmem:[%s202 + $0xc8] sm:$0xff]
        %v288 = vld [vmem:[%s202 + $0xd0] sm:$0xff]
        %v289 = vld [vmem:[%s202 + $0xd8] sm:$0xff]
        %v290 = vld [vmem:[%s202 + $0xe0] sm:$0xff]
        %v291 = vld [vmem:[%s202 + $0xe8] sm:$0xff]
        %v292 = vld [vmem:[%s202 + $0xf0] sm:$0xff]
        %v293 = vld [vmem:[%s202 + $0xf8] sm:$0xff]
        %vm294 = vcmask 588800
        %v296 = vsel %vm294, %v261, 0
        %v299 = vsel %vm294, %v263, 0
        %v302 = vsel %vm294, %v265, 0
        %v305 = vsel %vm294, %v267, 0
        %v308 = vsel %vm294, %v269, 0
        %v311 = vsel %vm294, %v271, 0
        %v314 = vsel %vm294, %v273, 0
        %v317 = vsel %vm294, %v275, 0
        %v320 = vsel %vm294, %v277, 0
        %v323 = vsel %vm294, %v279, 0
        %v326 = vsel %vm294, %v281, 0
        %v329 = vsel %vm294, %v283, 0
        %v332 = vsel %vm294, %v285, 0
        %v335 = vsel %vm294, %v287, 0
        %v338 = vsel %vm294, %v289, 0
        %v341 = vsel %vm294, %v291, 0
        %v344 = vsel %vm294, %v293, 0
        %346 = vmatprep.subr.mxu0 %v344
        %347 = vmatpush1.xpose.msra.mxu0 %v292
        %348 = vmatprep.subr.mxu0 %v341
        %349 = vmatpush1.xpose.msra.mxu0 %v290
        %350 = vmatprep.subr.mxu0 %v338
        %351 = vmatpush1.xpose.msra.mxu0 %v288
        %352 = vmatprep.subr.mxu0 %v335
        %353 = vmatpush1.xpose.msra.mxu0 %v286
        %354 = vmatprep.subr.mxu0 %v332
        %355 = vmatpush1.xpose.msra.mxu0 %v284
        %356 = vmatprep.subr.mxu0 %v329
        %357 = vmatpush1.xpose.msra.mxu0 %v282
        %358 = vmatprep.subr.mxu0 %v326
        %359 = vmatpush1.xpose.msra.mxu0 %v280
        %360 = vmatprep.subr.mxu0 %v323
        %361 = vmatpush1.xpose.msra.mxu0 %v278
        %362 = vmatprep.subr.mxu0 %v320
        %363 = vmatpush1.xpose.msra.mxu0 %v276
        %364 = vmatprep.subr.mxu0 %v317
        %365 = vmatpush1.xpose.msra.mxu0 %v274
        %366 = vmatprep.subr.mxu0 %v314
        %367 = vmatpush1.xpose.msra.mxu0 %v272
        %368 = vmatprep.subr.mxu0 %v311
        %369 = vmatpush1.xpose.msra.mxu0 %v270
        %370 = vmatprep.subr.mxu0 %v308
        %371 = vmatpush1.xpose.msra.mxu0 %v268
        %372 = vmatprep.subr.mxu0 %v305
        %373 = vmatpush1.xpose.msra.mxu0 %v266
        %374 = vmatprep.subr.mxu0 %v302
        %375 = vmatpush1.xpose.msra.mxu0 %v264
        %376 = vmatprep.subr.mxu0 %v299
        %377 = vmatpush1.xpose.msra.mxu0 %v262
        %378 = vmatprep.subr.mxu0 0.0
        %379 = vmatpush2.xpose.msra.mxu0 0.0
        %380 = vmatprep.subr.mxu0 0.0
        %381 = vmatpush2.xpose.msra.mxu0 0.0
        %382 = vmatprep.subr.mxu0 0.0
        %383 = vmatpush2.xpose.msra.mxu0 0.0
        %384 = vmatprep.subr.mxu0 0.0
        %385 = vmatpush2.xpose.msra.mxu0 0.0
        %386 = vmatprep.subr.mxu0 0.0
        %387 = vmatpush2.xpose.msra.mxu0 0.0
        %388 = vmatprep.subr.mxu0 0.0
        %389 = vmatpush2.xpose.msra.mxu0 0.0
        %390 = vmatprep.subr.mxu0 0.0
        %391 = vmatpush2.xpose.msra.mxu0 0.0
        %392 = vmatprep.subr.mxu0 0.0
        %393 = vmatpush2.xpose.msra.mxu0 0.0
        %394 = vmatprep.subr.mxu0 0.0
        %395 = vmatpush2.xpose.msra.mxu0 0.0
        %396 = vmatprep.subr.mxu0 0.0
        %397 = vmatpush2.xpose.msra.mxu0 0.0
        %398 = vmatprep.subr.mxu0 0.0
        %399 = vmatpush2.xpose.msra.mxu0 0.0
        %400 = vmatprep.subr.mxu0 0.0
        %401 = vmatpush2.xpose.msra.mxu0 0.0
        %402 = vmatprep.subr.mxu0 0.0
        %403 = vmatpush2.xpose.msra.mxu0 0.0
        %404 = vmatprep.subr.mxu0 0.0
        %405 = vmatpush2.xpose.msra.mxu0 0.0
        %406 = vmatprep.subr.mxu0 0.0
        %407 = vmatpush2.xpose.msra.mxu0 0.0
        %408 = vmatprep.subr.mxu0 0.0
        %409 = vmatpush2.xpose.msra.mxu0 0.0
        %410 = vmatprep.mubr.f32.mxu0 %v296
        %411 = vmatmul.mubr.f32.gmra.mxu0 %v260
        %v412 = vpop.f32.mrf.mxu0
        %v413 = vadd.f32 0.0, %v412
        %v414 = vpop.f32.mrf.mxu0
        %415 = vdwg.mxu0
        %s416 = smul.u32 %s17, 128
        %v417 = vlaneseq
        %v418 = vand.u32 %v417, 127
        %v419 = vstv %s416
        %v420 = vadd.s32 %v419, %v418
        %vm421 = vcmp.lt.s32.totalorder %v420, 500
        %v422 = vld [vmem:[%s211] sm:$0x1]
        %v423 = vmul.f32 %v422, %v413
        %v424 = vmax.f32 %v413, 0.0
        %v425 = vand.u32 2147483647, %v413
        %v426 = vsub.f32 0.0, %v425
        %v427 = vmul.f32 %v426, 1.442695
        %v428 = vpow.pop %v427
        %v429 = vadd.f32 %v428, 1.0
        %v430 = vlog2.pop %v429
        %v431 = vmul.f32 %v430, 0.6931472
        %v432 = vmul.f32 -0.5, %v428
        %v433 = vadd.f32 %v432, 1.0
        %v434 = vmul.f32 %v433, %v428
        %v435 = vand.u32 2147483647, %v428
        %vm436 = vcmp.lt.f32.partialorder %v435, 0.0004427343
        %v437 = vsel %vm436, %v434, %v431
        %v438 = vadd.f32 %v424, %v437
        %v439 = vsub.f32 %v423, %v438
        %v440 = vsel %vm421, %v439, 0.0
        %vm441 = vcmask 1040384
        %v442 = vsel %vm441, %v440, 0.0
        %443 = vadd.xlane.f32.xlu0 %v442
        %v444 = vpop.xlane.xlu0 %443
        %v445 = vrot.slane %v444, 4
        %v446 = vadd.f32 %v444, %v445
        %v447 = vrot.slane %v446, 2
        %v448 = vadd.f32 %v446, %v447
        %v449 = vrot.slane %v448, 1
        %v450 = vadd.f32 %v448, %v449
        %s451 = vtos %v450
        %s452 = ssub.f32 0.0, %s451
        %v453 = vstv %s452
        %454 = vst [vmem:[%s191] sm:$0x1] %v453
        %p455 = scmp.eq.s32.totalorder %s17, 0
        // Predicated region
        $region33: #{tpu_custom_call.1} parent=31 // pred_check
          %p456 = pneg %p455
        $region34: #{tpu_custom_call.1} parent=31 // pred_check_branch
          %458 = sbr.rel (%p456) target = $region36
        $region35: #{tpu_custom_call.1} parent=31 // pred_region
          %v459 = vlog2.pop %v244
          %v460 = vmul.f32 %v459, 0.6931472
          %v461 = vlog2.pop %v245
          %v462 = vmul.f32 %v461, 0.6931472
          %v463 = vsub.f32 0.0, %v460
          %v464 = vsub.f32 0.0, %v462
          %v465 = vsub.f32 %v463, 0.9189385
          %v466 = vsub.f32 %v464, 0.9189385
          %v467 = vmul.f32 %v212, 0.5
          %v468 = vmul.f32 %v213, 0.5
          %v469 = vmul.f32 %v467, %v212
          %v470 = vmul.f32 %v468, %v213
          %v473 = vrot.slane %v469, 1
          %v474 = vrot.slane %v470, 1
          %v477 = vsub.f32 %v465, %v473
          %v478 = vsub.f32 %v466, %v474
          %v481 = vrot.slane %v477, 1
          %v482 = vrot.slane %v478, 1
          %v485 = vsel %vm441, %v481, 0.0
          %vm486 = vcmask 581632
          %v487 = vsel %vm486, %v482, 0.0
          %v488 = vadd.f32 %v485, %v487
          %489 = vadd.xlane.f32.xlu0 %v488
          %v490 = vpop.xlane.xlu0 %489
          %v491 = vrot.slane %v490, 4
          %v492 = vadd.f32 %v490, %v491
          %v493 = vrot.slane %v492, 2
          %v494 = vadd.f32 %v492, %v493
          %v495 = vrot.slane %v494, 1
          %v496 = vadd.f32 %v494, %v495
          %s497 = vtos %v496
          %v498 = vmul.f32 %v260, 0.5
          %v499 = vmul.f32 %v261, 0.5
          %v500 = vmul.f32 %v498, %v260
          %v501 = vmul.f32 %v499, %v261
          %v502 = vsub.f32 -0.9189385, %v500
          %v503 = vsub.f32 -0.9189385, %v501
          %v504 = vsel %vm441, %v502, 0.0
          %v505 = vsel %vm486, %v503, 0.0
          %v506 = vadd.f32 %v504, %v505
          %507 = vadd.xlane.f32.xlu0 %v506
          %v508 = vpop.xlane.xlu0 %507
          %v509 = vrot.slane %v508, 4
          %v510 = vadd.f32 %v508, %v509
          %v511 = vrot.slane %v510, 2
          %v512 = vadd.f32 %v510, %v511
          %v513 = vrot.slane %v512, 1
          %v514 = vadd.f32 %v512, %v513
          %s515 = vtos %v514
          %v516 = vld [vmem:[%s191] sm:$0x1]
          %s517 = ssub.f32 %s497, %s515
          %v518 = vstv %s517
          %v519 = vadd.f32 %v516, %v518
          %520 = vst [vmem:[%s191] sm:$0x1] %v519
        $region36: #{tpu_custom_call.1} parent=31 // pred_fallthru
          _
        %s521 = sand.u32 %s98, 1
        %s522 = scalar_lea.sflag [#allocation3], %s521
        %s523 = sand.u32 %s98, 1
        %s524 = scalar_lea.vmem [#allocation2], %s523
        // Predicated region
        $region37: #{tpu_custom_call.1} parent=31 // pred_check
          %p525 = pneg %p108
        $region38: #{tpu_custom_call.1} parent=31 // pred_check_branch
          %527 = sbr.rel (%p525) target = $region40
        $region39: #{tpu_custom_call.1} parent=31 // pred_region
          %s529 = ssub.s32 16, 16
          %530 = vsyncadd %s522, %s529
          %s531 = smul.addr %s17, 16
          %s532 = scalar_lea.hbm %s3, %s531
          %s534 = sshll.u32 %s524, 4
          %s535 = int_to_ptr.vmem [resolvable:$true] %s534
          %537 = dma.vmem_to_hbm [thread:$0]  %s535, 16, %s532, %s522
        $region40: #{tpu_custom_call.1} parent=31 // pred_fallthru
          _
      $region32: #{tpu_custom_call.1} parent=5 // pred_fallthru
        _
      %p538 = scmp.le.s32.totalorder 2, %s12
      // Predicated region
      $region41: #{tpu_custom_call.1} parent=5 // pred_check
        %p539 = pneg %p538
      $region42: #{tpu_custom_call.1} parent=5 // pred_check_branch
        %541 = sbr.rel (%p539) target = $region44
      $region43: #{tpu_custom_call.1} parent=5 // pred_region
        %s542 = ssub.s32 %s12, 2
        // Predicated region
        $region45: #{tpu_custom_call.1} parent=43 // pred_check
          %p543 = pneg %p114
        $region46: #{tpu_custom_call.1} parent=43 // pred_check_branch
          %545 = sbr.rel (%p543) target = $region48
        $region47: #{tpu_custom_call.1} parent=43 // pred_region
          %s546 = sand.u32 %s99, 1
          %s547 = scalar_lea.sflag [#allocation3], %s546
          %s548 = sand.u32 %s99, 1
          %s549 = scalar_lea.vmem [#allocation2], %s548
          %550 = dma.done %s547, 16
        $region48: #{tpu_custom_call.1} parent=43 // pred_fallthru
          _
      $region44: #{tpu_custom_call.1} parent=5 // pred_fallthru
        _
    $region6: #{tpu_custom_call.1} parent=1 // loop_footer
      %s16 = sadd.s32 1, %s12
    $region7: #{tpu_custom_call.1} parent=1 // loop_footer_branch
      %11 = sbr.rel target = $region3
    $region8: #{tpu_custom_call.1} parent=1 // loop_exit
      _
    %551 = vsyncpa [#allocation3], 1
    %s552 = scalar_lea.sflag [#allocation3], 1
    %553 = vsyncpa %s552, 1

</llo_original>
